<compile_context>
chip_gen: v5e
topology: v5e:2x2
jax: 0.10.0
libtpu: 0.0.40
codegen_flags: <defaults>
</compile_context>

<pallas_src>
import jax
import jax.numpy as jnp
from jax.experimental import pallas as pl
from jax.experimental.pallas import tpu as pltpu


def self_attention_kernel(x_ref, wqkv_ref, o_ref):
    bb, S, D = x_ref.shape
    x = x_ref[...]                                            # [bb, S, D] f32

    # ---- fused QKV projection, batch*seq folded onto sublanes -------------
    xf = x.reshape(bb * S, D)                                 # layout no-op (S == 8)
    qkv = jnp.dot(xf, wqkv_ref[...],
                  preferred_element_type=jnp.float32)         # [bb*S, 3D], one MXU pass
    qkv = qkv.reshape(bb, S, 3 * D)                           # split leading dim back

    q = qkv[..., 0 * D:1 * D]
    k = qkv[..., 1 * D:2 * D]
    v = qkv[..., 2 * D:3 * D]

    # ---- attention ---------------------------------------------------------
    # scores = Q @ K^T, contracting the feature axis directly (no transpose).
    scores = jnp.einsum('bid,bjd->bij', q, k,
                        preferred_element_type=jnp.float32)   # [bb, S, S]

    # Numerically stable softmax over the last axis (matches nn.Softmax(dim=-1)).
    m = jnp.max(scores, axis=-1, keepdims=True)
    e = jnp.exp(scores - m)
    attn = e / jnp.sum(e, axis=-1, keepdims=True)             # exact divide

    out = jnp.einsum('bij,bjd->bid', attn, v,
                     preferred_element_type=jnp.float32)      # [bb, S, D]
    o_ref[...] = out.astype(o_ref.dtype)


def _pick_batch_block(batch, cap=256):
    """Largest divisor of `batch` that (a) keeps the per-step VMEM footprint
    small and (b) leaves a grid of >= 2 steps so v7x's two TensorCores can
    split the 'parallel' batch axis (harmless on single-TC v5e/v6e)."""
    if batch <= 1:
        return 1
    target = min(cap, batch // 2)
    best = 1
    for d in range(1, target + 1):
        if batch % d == 0:
            best = d
    return best


def self_attention(x, w_q, w_k, w_v, *, batch_block=None):
    """Forward pass of the SelfAttention module.

    x: [S, D] (original no-batch module contract) or [B, S, D]. Returns same rank.
    """
    squeeze = x.ndim == 2
    if squeeze:
        x = x[None]
    x = x.astype(jnp.float32)
    B, S, D = x.shape

    # Fuse the three projection weights once, outside the kernel.
    w_qkv = jnp.concatenate([w_q, w_k, w_v], axis=1).astype(jnp.float32)  # [D, 3D]

    if batch_block is None:
        batch_block = _pick_batch_block(B)
    assert B % batch_block == 0, "batch must be divisible by batch_block"

    out = pl.pallas_call(
        self_attention_kernel,
        out_shape=jax.ShapeDtypeStruct((B, S, D), jnp.float32),
        grid=(B // batch_block,),
        in_specs=[
            pl.BlockSpec((batch_block, S, D), lambda b: (b, 0, 0)),
            pl.BlockSpec((D, 3 * D), lambda b: (0, 0)),
        ],
        out_specs=pl.BlockSpec((batch_block, S, D), lambda b: (b, 0, 0)),
        compiler_params=pltpu.CompilerParams(
            dimension_semantics=("parallel",),
            vmem_limit_bytes=32 * 1024 * 1024,
        ),
    )(x, w_qkv)

    return out[0] if squeeze else out


def self_attention_ref(x, w_q, w_k, w_v):
    q = x @ w_q
    k = x @ w_k
    v = x @ w_v
    attn = jax.nn.softmax(q @ jnp.swapaxes(k, -2, -1), axis=-1)
    return attn @ v


if __name__ == "__main__":
    key = jax.random.PRNGKey(0)
    k_x, k_xb, k_q, k_k, k_v = jax.random.split(key, 5)

    S, D = 8, 6   # module hardcodes 6x6 projection weights; sequence length 8
    B = 8         # small batch -> grid of 2 steps (batch_block = 4)

    # Deterministic parameter init mirroring torch.randn(6, 6) / 100.
    w_q = jax.random.normal(k_q, (D, D), dtype=jnp.float32) / 100.0
    w_k = jax.random.normal(k_k, (D, D), dtype=jnp.float32) / 100.0
    w_v = jax.random.normal(k_v, (D, D), dtype=jnp.float32) / 100.0

    # Single-instance input, exactly as the original no-batch module.
    x = jax.random.normal(k_x, (S, D), dtype=jnp.float32)
    out = jax.block_until_ready(self_attention(x, w_q, w_k, w_v))
    ref = self_attention_ref(x, w_q, w_k, w_v)
    assert out.shape == (S, D)
    assert jnp.allclose(out, ref, atol=1e-5, rtol=1e-4), "single-instance mismatch"

    # Batched input: many attention instances, multi-step 'parallel' grid.
    xb = jax.random.normal(k_xb, (B, S, D), dtype=jnp.float32)
    outb = jax.block_until_ready(self_attention(xb, w_q, w_k, w_v))
    refb = self_attention_ref(xb, w_q, w_k, w_v)
    assert outb.shape == (B, S, D)
    assert jnp.allclose(outb, refb, atol=1e-5, rtol=1e-4), "batched mismatch"

    print("KERNEL_OK")
</pallas_src>

<mosaic_0001>
module attributes {stable_mosaic.version = 11 : i64} {
  func.func @self_attention_kernel(%arg0: i32, %arg1: memref<1x8x6xf32, #tpu.memory_space<vmem>>, %arg2: memref<6x18xf32, #tpu.memory_space<vmem>>, %arg3: memref<1x8x6xf32, #tpu.memory_space<vmem>>) attributes {dimension_semantics = [#tpu.dimension_semantics<parallel>], iteration_bounds = array<i64: 1>, scalar_prefetch = 0 : i64, scratch_operands = 0 : i64, tpu.core_type = #tpu.core_type<tc>, window_params = [{transform_indices = @transform_0, window_bounds = array<i64: 1, 8, 6>}, {pipeline_mode = #tpu.pipeline_mode<synchronous>, transform_indices = @transform_1, window_bounds = array<i64: 6, 18>}, {transform_indices = @transform_2, window_bounds = array<i64: 1, 8, 6>}]} {
    %c0 = arith.constant 0 : index
    %c0_0 = arith.constant 0 : index
    %c0_1 = arith.constant 0 : index
    %0 = vector.load %arg1[%c0, %c0_0, %c0_1] : memref<1x8x6xf32, #tpu.memory_space<vmem>>, vector<1x8x6xf32>
    %1 = vector.shape_cast %0 : vector<1x8x6xf32> to vector<8x6xf32>
    %c0_2 = arith.constant 0 : index
    %c0_3 = arith.constant 0 : index
    %2 = vector.load %arg2[%c0_2, %c0_3] : memref<6x18xf32, #tpu.memory_space<vmem>>, vector<6x18xf32>
    %cst = arith.constant dense<0.000000e+00> : vector<8x18xf32>
    %3 = tpu.matmul %1, %2, %cst {dimension_numbers = #tpu.dot_dimension_numbers<[1], [0], [0], [1], [0, 0, 1, 1], [], []>} : vector<8x6xf32>, vector<6x18xf32>, vector<8x18xf32> -> vector<8x18xf32>
    %4 = vector.shape_cast %3 : vector<8x18xf32> to vector<1x8x18xf32>
    %5 = vector.extract_strided_slice %4 {offsets = [0, 0, 0], sizes = [1, 8, 6], strides = [1, 1, 1]} : vector<1x8x18xf32> to vector<1x8x6xf32>
    %6 = vector.extract_strided_slice %4 {offsets = [0, 0, 6], sizes = [1, 8, 6], strides = [1, 1, 1]} : vector<1x8x18xf32> to vector<1x8x6xf32>
    %7 = vector.extract_strided_slice %4 {offsets = [0, 0, 12], sizes = [1, 8, 6], strides = [1, 1, 1]} : vector<1x8x18xf32> to vector<1x8x6xf32>
    "tpu.trace_start"() <{level = 10 : i32, message = "bid,bjd->bij"}> : () -> ()
    %cst_4 = arith.constant dense<0.000000e+00> : vector<1x8x8xf32>
    %8 = tpu.matmul %5, %6, %cst_4 {dimension_numbers = #tpu.dot_dimension_numbers<[2], [2], [1], [1], [0, 0, 0, 1, 1, 1], [0], [0]>} : vector<1x8x6xf32>, vector<1x8x6xf32>, vector<1x8x8xf32> -> vector<1x8x8xf32>
    "tpu.trace_stop"() : () -> ()
    %cst_5 = arith.constant dense<0xFF800000> : vector<1x8xf32>
    %9 = vector.multi_reduction <maximumf>, %8, %cst_5 [2] : vector<1x8x8xf32> to vector<1x8xf32>
    %10 = vector.shape_cast %9 : vector<1x8xf32> to vector<1x8x1xf32>
    %11 = vector.broadcast %10 : vector<1x8x1xf32> to vector<1x8x8xf32>
    %12 = arith.subf %8, %11 : vector<1x8x8xf32>
    %13 = math.exp %12 : vector<1x8x8xf32>
    %cst_6 = arith.constant dense<0.000000e+00> : vector<1x8xf32>
    %14 = vector.multi_reduction <add>, %13, %cst_6 [2] : vector<1x8x8xf32> to vector<1x8xf32>
    %15 = vector.shape_cast %14 : vector<1x8xf32> to vector<1x8x1xf32>
    %16 = vector.broadcast %15 : vector<1x8x1xf32> to vector<1x8x8xf32>
    %17 = arith.divf %13, %16 : vector<1x8x8xf32>
    "tpu.trace_start"() <{level = 10 : i32, message = "bij,bjd->bid"}> : () -> ()
    %cst_7 = arith.constant dense<0.000000e+00> : vector<1x8x6xf32>
    %18 = tpu.matmul %17, %7, %cst_7 {dimension_numbers = #tpu.dot_dimension_numbers<[2], [1], [1], [2], [0, 0, 0, 1, 1, 2], [0], [0]>} : vector<1x8x8xf32>, vector<1x8x6xf32>, vector<1x8x6xf32> -> vector<1x8x6xf32>
    "tpu.trace_stop"() : () -> ()
    %c0_8 = arith.constant 0 : index
    %c0_9 = arith.constant 0 : index
    %c0_10 = arith.constant 0 : index
    %19 = vector.load %arg3[%c0_8, %c0_9, %c0_10] : memref<1x8x6xf32, #tpu.memory_space<vmem>>, vector<1x8x6xf32>
    tpu.vector_store %arg3[%c0_8, %c0_9, %c0_10], %18 {strides = array<i32>} : memref<1x8x6xf32, #tpu.memory_space<vmem>>, vector<1x8x6xf32>,
    return
  }
  func.func @transform_0(%arg0: i32) -> (i32, i32, i32) {
    %c0_i32 = arith.constant 0 : i32
    %c0_i32_0 = arith.constant 0 : i32
    %c0_i32_1 = arith.constant 0 : i32
    return %arg0, %c0_i32, %c0_i32_0 : i32, i32, i32
  }
  func.func @transform_1(%arg0: i32) -> (i32, i32) {
    %c0_i32 = arith.constant 0 : i32
    %c0_i32_0 = arith.constant 0 : i32
    %c0_i32_1 = arith.constant 0 : i32
    return %c0_i32, %c0_i32_0 : i32, i32
  }
  func.func @transform_2(%arg0: i32) -> (i32, i32, i32) {
    %c0_i32 = arith.constant 0 : i32
    %c0_i32_0 = arith.constant 0 : i32
    %c0_i32_1 = arith.constant 0 : i32
    return %arg0, %c0_i32, %c0_i32_0 : i32, i32, i32
  }
}

</mosaic_0001>

<llo_original>
// kernel: tpu_custom_call.1
$region0: #{tpu_custom_call.1}
  #allocation0 [shape = 'u32[]', space=smem, size = 0x4, offset = 0x4, fixed_abs, tag = 'smem constant byte address 0x4 - core index']
  #allocation1 [shape = 'u32[72,128]{1,0:T(1,128)}', space=vmem, size = 0x9000, scoped, tag = 'internal scratch']
  %s0 = inlined_call_operand.vmem [shape: f32[1,8,6], index: 0, kind: input, shape index: {}]
  %s1 = inlined_call_operand.vmem [shape: f32[6,18], index: 1, kind: input, shape index: {}]
  %s2 = inlined_call_operand.vmem [shape: f32[1,8,6], index: 2, kind: output, shape index: {}]
  %s3 = sld [smem:[#allocation0]]
  $region18: #{tpu_custom_call.1} parent=0
    _
  %s5 = ssub.s32 1, %s3
  %s6 = scalar_select 0, %s5, %s3
  // Predicated region
  $region2: #{tpu_custom_call.1} parent=0 // pred_check
    _
  $region3: #{tpu_custom_call.1} parent=0 // pred_check_branch
    %8 = sbr.rel (0) target = $region5
  $region4: #{tpu_custom_call.1} parent=0 // pred_region
    _
  $region5: #{tpu_custom_call.1} parent=0 // pred_fallthru
    _
  // Predicated region
  $region6: #{tpu_custom_call.1} parent=0 // pred_check
    _
  $region7: #{tpu_custom_call.1} parent=0 // pred_check_branch
    %10 = sbr.rel (0) target = $region9
  $region8: #{tpu_custom_call.1} parent=0 // pred_region
    _
  $region9: #{tpu_custom_call.1} parent=0 // pred_fallthru
    _
  %v11 = vld [vmem:[%s0] sm:$0xff]
  %v12 = vld [vmem:[%s1] sm:$0x3f]
  %vm13 = vcmask 48128
  %v15 = vsel %vm13, %v11, 0
  %vm17 = vcmask 1045504
  %v19 = vsel %vm17, %v12, 0
  %21 = vmatpush.msra.mxu0 0.0
  %22 = vmatpush.msra.mxu0 0.0
  %23 = vmatpush.msra.mxu0 0.0
  %24 = vmatpush.msra.mxu0 0.0
  %25 = vmatpush.msra.mxu0 0.0
  %26 = vmatpush.msra.mxu0 0.0
  %27 = vmatpush.msra.mxu0 0.0
  %28 = vmatpush.msra.mxu0 0.0
  %29 = vmatpush.msra.mxu0 0.0
  %30 = vmatpush.msra.mxu0 0.0
  %31 = vmatpush.msra.mxu0 0.0
  %32 = vmatpush.msra.mxu0 0.0
  %33 = vmatpush.msra.mxu0 0.0
  %34 = vmatpush.msra.mxu0 0.0
  %35 = vmatpush.msra.mxu0 0.0
  %36 = vmatpush.msra.mxu0 %v19
  %37 = vmatmul.f32.gmra.mxu0 %v15
  %v38 = vpop.f32.mrf.mxu0
  %v39 = vadd.f32 0.0, %v38
  %40 = vdwg.mxu0
  %42 = vrot.lane.b32.xlu0 %v39, 122
  %v43 = vpop.permute.xlu0 %42
  %v44 = vsel %vm13, %v39, 0
  %v46 = vsel %vm13, %v43, 0
  %48 = vmatpush.xpose.msra.mxu0 0.0
  %49 = vmatpush.xpose.msra.mxu0 0.0
  %50 = vmatpush.xpose.msra.mxu0 0.0
  %51 = vmatpush.xpose.msra.mxu0 0.0
  %52 = vmatpush.xpose.msra.mxu0 0.0
  %53 = vmatpush.xpose.msra.mxu0 0.0
  %54 = vmatpush.xpose.msra.mxu0 0.0
  %55 = vmatpush.xpose.msra.mxu0 0.0
  %56 = vmatpush.xpose.msra.mxu0 0.0
  %57 = vmatpush.xpose.msra.mxu0 0.0
  %58 = vmatpush.xpose.msra.mxu0 0.0
  %59 = vmatpush.xpose.msra.mxu0 0.0
  %60 = vmatpush.xpose.msra.mxu0 0.0
  %61 = vmatpush.xpose.msra.mxu0 0.0
  %62 = vmatpush.xpose.msra.mxu0 0.0
  %63 = vmatpush.xpose.msra.mxu0 %v46
  %64 = vmatmul.f32.gmra.mxu0 %v44
  %v65 = vpop.f32.mrf.mxu0
  %v66 = vadd.f32 0.0, %v65
  %67 = vdwg.mxu0
  %vm68 = vcmask 64512
  %v69 = vsel %vm68, %v66, -inf
  %70 = vmax.xlane.f32.xlu0 %v69
  %v71 = vpop.xlane.xlu0 %70
  %v72 = vsub.f32 %v66, %v71
  %v73 = vmul.f32 %v72, 1.442695
  %v74 = vpow.pop %v73
  %v75 = vsel %vm68, %v74, 0.0
  %76 = vadd.xlane.f32.xlu0 %v75
  %v77 = vpop.xlane.xlu0 %76
  %v78 = vrcp.pop %v77
  %v79 = vmul.f32 %v77, %v78
  %v80 = vsub.f32 1.0, %v79
  %v81 = vmul.f32 %v78, %v80
  %v82 = vadd.f32 %v78, %v81
  %vm83 = vweird.f32 %v77
  %vm84 = vweird.f32 %v78
  %vm85 = vmor %vm83, %vm84
  %v86 = vsel %vm85, %v78, %v82
  %v87 = vand.u32 2147483647, %v77
  %vm88 = vcmp.eq.f32.partialorder %v87, 8.507059e+37
  %v89 = vand.u32 %v77, 2147483648
  %v90 = vor.u32 1.1754944e-38, %v89
  %v91 = vsel %vm88, %v90, %v86
  %v92 = vmul.f32 %v74, %v91
  %93 = vrot.lane.b32.xlu0 %v39, 116
  %v94 = vpop.permute.xlu0 %93
  %v97 = vsel %vm68, %v92, 0
  %99 = vmatpush.msra.mxu0 0.0
  %100 = vmatpush.msra.mxu0 0.0
  %101 = vmatpush.msra.mxu0 0.0
  %102 = vmatpush.msra.mxu0 0.0
  %103 = vmatpush.msra.mxu0 0.0
  %104 = vmatpush.msra.mxu0 0.0
  %105 = vmatpush.msra.mxu0 0.0
  %106 = vmatpush.msra.mxu0 0.0
  %107 = vmatpush.msra.mxu0 0.0
  %108 = vmatpush.msra.mxu0 0.0
  %109 = vmatpush.msra.mxu0 0.0
  %110 = vmatpush.msra.mxu0 0.0
  %111 = vmatpush.msra.mxu0 0.0
  %112 = vmatpush.msra.mxu0 0.0
  %113 = vmatpush.msra.mxu0 0.0
  %114 = vmatpush.msra.mxu0 %v94
  %115 = vmatmul.f32.gmra.mxu0 %v97
  %v116 = vpop.f32.mrf.mxu0
  %v117 = vadd.f32 0.0, %v116
  %118 = vdwg.mxu0
  %119 = vst.msk [vmem:[%s2] sm:$0xff] %vm13, %v117
  // Predicated region
  $region10: #{tpu_custom_call.1} parent=0 // pred_check
    _
  $region11: #{tpu_custom_call.1} parent=0 // pred_check_branch
    %121 = sbr.rel (0) target = $region13
  $region12: #{tpu_custom_call.1} parent=0 // pred_region
    _
  $region13: #{tpu_custom_call.1} parent=0 // pred_fallthru
    _
  // Predicated region
  $region14: #{tpu_custom_call.1} parent=0 // pred_check
    _
  $region15: #{tpu_custom_call.1} parent=0 // pred_check_branch
    %123 = sbr.rel (0) target = $region17
  $region16: #{tpu_custom_call.1} parent=0 // pred_region
    _
  $region17: #{tpu_custom_call.1} parent=0 // pred_fallthru
    _

</llo_original>
